<compile_context>
chip_gen: v5e
topology: v5e:2x2
jax: 0.10.0
libtpu: 0.0.40
codegen_flags: <defaults>
</compile_context>

<pallas_src>
import functools

import jax
import jax.numpy as jnp
from jax.experimental import pallas as pl
from jax.experimental.pallas import tpu as pltpu

_NQ = 8  # partial sums per tile; sublane slots:
# 0: sum(w*err^2)   1: sum(fa)       2: sum(a)       3: sum(w*fa*a)
# 4: sum(w*fa^2)    5: sum(w*a^2)    6: sum(w*fa)    7: sum(w*a)


def _round_up(x, m):
    return ((x + m - 1) // m) * m


def _cdiv(a, b):
    return (a + b - 1) // b


def _partial_sums_kernel(w_ref, o_ref, t_ref, c_ref, out_ref, *,
                         mean, std, tb, tc, row_tail, col_tail):
    # Upcast in-kernel (inputs may be bf16 -> kernel streams half the HBM bytes).
    w = w_ref[...].astype(jnp.float32)    # (1, tc)  lat weights, bcast over rows
    o = o_ref[...].astype(jnp.float32)    # (tb, tc) forecast tile
    t = t_ref[...].astype(jnp.float32)    # (tb, tc) truth tile
    c = c_ref[...].astype(jnp.float32)    # (tb, tc) climatology tile

    err = o - t
    d = mean - c                          # shared by both anomaly chains
    fa = o * std + d                      # forecast anomaly (un-centered)
    a = t * std + d                       # true anomaly (un-centered)

    # Ragged-tile masking. `row_tail` / `col_tail` are static Python ints, so
    # this block is only traced when the grid doesn't divide the array; the
    # evenly-divisible case (incl. this script's test) emits no extra ops.
    if row_tail or col_tail:
        mask = None
        if row_tail:
            valid_rows = jnp.where(pl.program_id(0) == pl.num_programs(0) - 1,
                                   row_tail, tb)
            rid = jax.lax.broadcasted_iota(jnp.int32, (tb, tc), 0)
            mask = rid < valid_rows
        if col_tail:
            valid_cols = jnp.where(pl.program_id(1) == pl.num_programs(1) - 1,
                                   col_tail, tc)
            cid = jax.lax.broadcasted_iota(jnp.int32, (tb, tc), 1)
            cmask = cid < valid_cols
            mask = cmask if mask is None else (mask & cmask)
            # Padded weight lanes may hold garbage (even Inf/NaN): select them
            # to 0 so zeroed anomalies never meet a non-finite weight.
            wcid = jax.lax.broadcasted_iota(jnp.int32, (1, tc), 1)
            w = jnp.where(wcid < valid_cols, w, 0.0)
        err = jnp.where(mask, err, 0.0)
        fa = jnp.where(mask, fa, 0.0)
        a = jnp.where(mask, a, 0.0)

    wfa = w * fa
    wa = w * a

    sums = (
        jnp.sum(w * err * err),           # 0: weighted squared error
        jnp.sum(fa),                      # 1: for global mean(fa)
        jnp.sum(a),                       # 2: for global mean(a)
        jnp.sum(wfa * a),                 # 3
        jnp.sum(wfa * fa),                # 4
        jnp.sum(wa * a),                  # 5
        jnp.sum(wfa),                     # 6
        jnp.sum(wa),                      # 7
    )

    # Pack the 8 scalars into a lane-dense (8, 128) output block: quantity q on
    # sublane q, replicated across lanes -> full unmasked vector store, and each
    # grid step owns its own block (megacore-safe parallel partials).
    sub = jax.lax.broadcasted_iota(jnp.int32, (_NQ, 128), 0)
    vals = jnp.zeros((_NQ, 128), jnp.float32)
    for q, s in enumerate(sums):
        vals = jnp.where(sub == q, s, vals)
    out_ref[...] = vals


def weighted_mse_acc_loss(output, target, clim, lat, mean, std):
    """output, target, clim: (B, C, H, W).  lat: (H,).  mean/std: Python scalars."""
    B, C, H, W = output.shape
    BC, HW = B * C, H * W
    n = jnp.float32(BC * HW)

    # Latitude weights cos(deg2rad(lat)) / mean (plain-JAX glue, tiny).
    wlat = jnp.cos(jnp.deg2rad(lat.astype(jnp.float32)))
    wlat = wlat / jnp.mean(wlat)
    # Per-element weight slab in the same lane-dense (1, H*W) layout as the data.
    w_slab = jnp.broadcast_to(wlat.reshape(H, 1), (H, W)).reshape(1, HW)

    # Keep inputs in their native dtype: no wrapper-side casts, and the
    # (B,C,H,W) -> (BC, HW) reshape of a contiguous array is free (no HBM copy).
    o2 = output.reshape(BC, HW)
    t2 = target.reshape(BC, HW)
    c2 = clim.reshape(BC, HW)

    # ---- per-generation tile sizing -----------------------------------------
    # Working set ~ 3 inputs x 2 pipeline buffers + ~8 f32 tile temporaries
    # ~ 16 x tile_bytes.  Stay under ~3/4 of physical VMEM.
    try:
        vmem_cap = int(pltpu.get_tpu_info().vmem_capacity_bytes)
    except Exception:            # query unavailable -> assume the smallest (v7x)
        vmem_cap = 64 << 20
    vmem_limit = max(min(vmem_cap * 3 // 4, 96 << 20), 32 << 20)
    tile_target = max(512 << 10, min(vmem_limit // 16, 4 << 20))  # bytes/input tile

    # Column (lane) axis: whole HW if it fits even at the minimal 8-row tile,
    # otherwise 128-multiple lane blocks (ragged tail masked in-kernel).  Keeps
    # tiles bounded at weather-scale H*W even on v7x's 64 MiB VMEM.
    max_lane_elems = tile_target // (8 * 4)
    if HW <= max_lane_elems:
        tc = HW
    else:
        tc = max(128, (max_lane_elems // 128) * 128)
    ncols = _cdiv(HW, tc)
    col_tail = HW % tc if ncols > 1 else 0

    # Row (sublane) axis: as many rows as fit the tile target, multiple of 8
    # (or the whole axis).  NO HBM-side padding: ragged tails are masked
    # in-kernel instead of copying the inputs with jnp.concatenate.
    row_bytes = tc * 4
    tb = max(8, (tile_target // row_bytes) // 8 * 8)
    if tb >= BC:
        tb = BC                  # whole axis in one block (== full dim is legal)
    elif ncols < 4 and BC >= 32 and BC * HW * 4 >= (2 << 20):
        # Keep >= ~4 row chunks so v7x's two TensorCores both get work, once the
        # problem is big enough to amortize the ~0.35 us/step fixed overhead.
        tb = min(tb, max(8, _round_up(_cdiv(BC, 4), 8)))
    nrows = _cdiv(BC, tb)
    row_tail = BC % tb

    kernel = functools.partial(
        _partial_sums_kernel,
        mean=float(mean), std=float(std),
        tb=tb, tc=tc, row_tail=row_tail, col_tail=col_tail)

    partials = pl.pallas_call(
        kernel,
        out_shape=jax.ShapeDtypeStruct((nrows, ncols, _NQ, 128), jnp.float32),
        grid_spec=pltpu.PrefetchScalarGridSpec(
            num_scalar_prefetch=0,
            grid=(nrows, ncols),
            in_specs=[
                pl.BlockSpec((1, tc), lambda i, j: (0, j)),    # lat-weight slab
                pl.BlockSpec((tb, tc), lambda i, j: (i, j)),   # forecast tile
                pl.BlockSpec((tb, tc), lambda i, j: (i, j)),   # truth tile
                pl.BlockSpec((tb, tc), lambda i, j: (i, j)),   # climatology tile
            ],
            out_specs=pl.BlockSpec((None, None, _NQ, 128),
                                   lambda i, j: (i, j, 0, 0)),
        ),
        compiler_params=pltpu.CompilerParams(
            dimension_semantics=("parallel", "parallel"),
            vmem_limit_bytes=vmem_limit),
    )(w_slab, o2, t2, c2)

    # ---- combine per-tile partials + centered-sum algebra (scalar glue) ----
    sums = jnp.sum(partials[:, :, :, 0], axis=(0, 1))
    s_mse, s_fa, s_a = sums[0], sums[1], sums[2]
    s_wfaa, s_wfa2, s_wa2 = sums[3], sums[4], sums[5]
    s_wfa, s_wa = sums[6], sums[7]

    # Total weight over real elements: each of the BC rows sums to W * sum(wlat).
    s_w = jnp.float32(BC * W) * jnp.sum(wlat)
    m_fa = s_fa / n
    m_a = s_a / n

    # Rebuild centered sums from the raw single-pass sums.
    # TODO(synk): the "textbook" centered-sum reconstruction in f32 can lose
    # digits at production scale if fa/a carry a large mean offset; consider a
    # compensated/two-pass combine if that regime matters.
    cov    = s_wfaa - m_a * s_wfa - m_fa * s_wa + m_fa * m_a * s_w
    var_fa = s_wfa2 - 2.0 * m_fa * s_wfa + m_fa * m_fa * s_w
    var_a  = s_wa2  - 2.0 * m_a  * s_wa  + m_a  * m_a  * s_w

    mse = s_mse / n
    acc = cov / jnp.sqrt(var_fa * var_a)
    return mse + (1.0 - acc)


def _reference(output, target, clim, lat, mean, std):
    H = output.shape[2]
    wlat = jnp.cos(jnp.deg2rad(lat.astype(jnp.float32)))
    wlat = wlat / jnp.mean(wlat)
    w4 = wlat.reshape(1, 1, H, 1)
    err = output - target
    mse = jnp.mean(err ** 2 * w4)
    fa = output * std + mean - clim
    a = target * std + mean - clim
    fap = fa - jnp.mean(fa)
    ap = a - jnp.mean(a)
    acc = jnp.sum(w4 * fap * ap) / jnp.sqrt(
        jnp.sum(w4 * fap ** 2) * jnp.sum(w4 * ap ** 2))
    return mse + (1.0 - acc)


if __name__ == "__main__":
    key = jax.random.PRNGKey(0)
    B, C, H, W = 2, 4, 16, 16
    k1, k2, k3 = jax.random.split(key, 3)

    # deterministic stand-ins for the scaler.pkl contents
    lat = jnp.linspace(-84.375, 84.375, H, dtype=jnp.float32)
    mean, std = 278.5, 21.3

    # output/target are standardized fields; climatology lives in
    # de-standardized units (like mean/std), matching real usage where
    # the anomalies fa/a have magnitude ~std.
    output = jax.random.normal(k1, (B, C, H, W), dtype=jnp.float32)
    target = jax.random.normal(k2, (B, C, H, W), dtype=jnp.float32)
    clim = mean + std * jax.random.normal(k3, (B, C, H, W), dtype=jnp.float32)

    loss = weighted_mse_acc_loss(output, target, clim, lat, mean, std)
    loss = jax.block_until_ready(loss)

    ref = jax.block_until_ready(_reference(output, target, clim, lat, mean, std))
    assert jnp.allclose(loss, ref, rtol=1e-4, atol=1e-4), (loss, ref)

    print("KERNEL_OK")
</pallas_src>

<mosaic_0001>
module attributes {stable_mosaic.version = 11 : i64} {
  func.func @_partial_sums_kernel(%arg0: i32, %arg1: i32, %arg2: memref<1x256xf32, #tpu.memory_space<vmem>>, %arg3: memref<8x256xf32, #tpu.memory_space<vmem>>, %arg4: memref<8x256xf32, #tpu.memory_space<vmem>>, %arg5: memref<8x256xf32, #tpu.memory_space<vmem>>, %arg6: memref<1x1x8x128xf32, #tpu.memory_space<vmem>>) attributes {dimension_semantics = [#tpu.dimension_semantics<parallel>, #tpu.dimension_semantics<parallel>], iteration_bounds = array<i64: 1, 1>, scalar_prefetch = 0 : i64, scratch_operands = 0 : i64, tpu.core_type = #tpu.core_type<tc>, window_params = [{transform_indices = @transform_0, window_bounds = array<i64: 1, 256>}, {transform_indices = @transform_1, window_bounds = array<i64: 8, 256>}, {transform_indices = @transform_2, window_bounds = array<i64: 8, 256>}, {transform_indices = @transform_3, window_bounds = array<i64: 8, 256>}, {transform_indices = @transform_4, window_bounds = array<i64: 1, 1, 8, 128>}]} {
    %c0 = arith.constant 0 : index
    %c0_0 = arith.constant 0 : index
    %0 = vector.load %arg2[%c0, %c0_0] : memref<1x256xf32, #tpu.memory_space<vmem>>, vector<1x256xf32>
    %c0_1 = arith.constant 0 : index
    %c0_2 = arith.constant 0 : index
    %1 = vector.load %arg3[%c0_1, %c0_2] : memref<8x256xf32, #tpu.memory_space<vmem>>, vector<8x256xf32>
    %c0_3 = arith.constant 0 : index
    %c0_4 = arith.constant 0 : index
    %2 = vector.load %arg4[%c0_3, %c0_4] : memref<8x256xf32, #tpu.memory_space<vmem>>, vector<8x256xf32>
    %c0_5 = arith.constant 0 : index
    %c0_6 = arith.constant 0 : index
    %3 = vector.load %arg5[%c0_5, %c0_6] : memref<8x256xf32, #tpu.memory_space<vmem>>, vector<8x256xf32>
    %4 = arith.subf %1, %2 : vector<8x256xf32>
    %cst = arith.constant 2.785000e+02 : f32
    %5 = vector.broadcast %cst : f32 to vector<8x256xf32>
    %6 = arith.subf %5, %3 : vector<8x256xf32>
    %cst_7 = arith.constant 2.130000e+01 : f32
    %7 = vector.broadcast %cst_7 : f32 to vector<8x256xf32>
    %8 = arith.mulf %1, %7 : vector<8x256xf32>
    %9 = arith.addf %8, %6 : vector<8x256xf32>
    %cst_8 = arith.constant 2.130000e+01 : f32
    %10 = vector.broadcast %cst_8 : f32 to vector<8x256xf32>
    %11 = arith.mulf %2, %10 : vector<8x256xf32>
    %12 = arith.addf %11, %6 : vector<8x256xf32>
    %13 = vector.broadcast %0 : vector<1x256xf32> to vector<8x256xf32>
    %14 = arith.mulf %13, %9 : vector<8x256xf32>
    %15 = vector.broadcast %0 : vector<1x256xf32> to vector<8x256xf32>
    %16 = arith.mulf %15, %12 : vector<8x256xf32>
    %17 = vector.broadcast %0 : vector<1x256xf32> to vector<8x256xf32>
    %18 = arith.mulf %17, %4 : vector<8x256xf32>
    %19 = arith.mulf %18, %4 : vector<8x256xf32>
    %20 = vector.shape_cast %19 : vector<8x256xf32> to vector<1x8x256xf32>
    %cst_9 = arith.constant dense<0.000000e+00> : vector<1xf32>
    %21 = vector.multi_reduction <add>, %20, %cst_9 [1, 2] : vector<1x8x256xf32> to vector<1xf32>
    %22 = vector.shape_cast %21 : vector<1xf32> to vector<1x1x1xf32>
    %23 = vector.extract %22[0, 0, 0] : f32 from vector<1x1x1xf32>
    %24 = vector.shape_cast %9 : vector<8x256xf32> to vector<1x8x256xf32>
    %cst_10 = arith.constant dense<0.000000e+00> : vector<1xf32>
    %25 = vector.multi_reduction <add>, %24, %cst_10 [1, 2] : vector<1x8x256xf32> to vector<1xf32>
    %26 = vector.shape_cast %25 : vector<1xf32> to vector<1x1x1xf32>
    %27 = vector.extract %26[0, 0, 0] : f32 from vector<1x1x1xf32>
    %28 = vector.shape_cast %12 : vector<8x256xf32> to vector<1x8x256xf32>
    %cst_11 = arith.constant dense<0.000000e+00> : vector<1xf32>
    %29 = vector.multi_reduction <add>, %28, %cst_11 [1, 2] : vector<1x8x256xf32> to vector<1xf32>
    %30 = vector.shape_cast %29 : vector<1xf32> to vector<1x1x1xf32>
    %31 = vector.extract %30[0, 0, 0] : f32 from vector<1x1x1xf32>
    %32 = arith.mulf %14, %12 : vector<8x256xf32>
    %33 = vector.shape_cast %32 : vector<8x256xf32> to vector<1x8x256xf32>
    %cst_12 = arith.constant dense<0.000000e+00> : vector<1xf32>
    %34 = vector.multi_reduction <add>, %33, %cst_12 [1, 2] : vector<1x8x256xf32> to vector<1xf32>
    %35 = vector.shape_cast %34 : vector<1xf32> to vector<1x1x1xf32>
    %36 = vector.extract %35[0, 0, 0] : f32 from vector<1x1x1xf32>
    %37 = arith.mulf %14, %9 : vector<8x256xf32>
    %38 = vector.shape_cast %37 : vector<8x256xf32> to vector<1x8x256xf32>
    %cst_13 = arith.constant dense<0.000000e+00> : vector<1xf32>
    %39 = vector.multi_reduction <add>, %38, %cst_13 [1, 2] : vector<1x8x256xf32> to vector<1xf32>
    %40 = vector.shape_cast %39 : vector<1xf32> to vector<1x1x1xf32>
    %41 = vector.extract %40[0, 0, 0] : f32 from vector<1x1x1xf32>
    %42 = arith.mulf %16, %12 : vector<8x256xf32>
    %43 = vector.shape_cast %42 : vector<8x256xf32> to vector<1x8x256xf32>
    %cst_14 = arith.constant dense<0.000000e+00> : vector<1xf32>
    %44 = vector.multi_reduction <add>, %43, %cst_14 [1, 2] : vector<1x8x256xf32> to vector<1xf32>
    %45 = vector.shape_cast %44 : vector<1xf32> to vector<1x1x1xf32>
    %46 = vector.extract %45[0, 0, 0] : f32 from vector<1x1x1xf32>
    %47 = vector.shape_cast %14 : vector<8x256xf32> to vector<1x8x256xf32>
    %cst_15 = arith.constant dense<0.000000e+00> : vector<1xf32>
    %48 = vector.multi_reduction <add>, %47, %cst_15 [1, 2] : vector<1x8x256xf32> to vector<1xf32>
    %49 = vector.shape_cast %48 : vector<1xf32> to vector<1x1x1xf32>
    %50 = vector.extract %49[0, 0, 0] : f32 from vector<1x1x1xf32>
    %51 = vector.shape_cast %16 : vector<8x256xf32> to vector<1x8x256xf32>
    %cst_16 = arith.constant dense<0.000000e+00> : vector<1xf32>
    %52 = vector.multi_reduction <add>, %51, %cst_16 [1, 2] : vector<1x8x256xf32> to vector<1xf32>
    %53 = vector.shape_cast %52 : vector<1xf32> to vector<1x1x1xf32>
    %54 = vector.extract %53[0, 0, 0] : f32 from vector<1x1x1xf32>
    %55 = tpu.iota {dimensions = array<i32: 0>} : vector<8x128xi32>
    %cst_17 = arith.constant 0.000000e+00 : f32
    %56 = vector.broadcast %cst_17 : f32 to vector<8x128xf32>
    %c0_i32 = arith.constant 0 : i32
    %57 = vector.broadcast %c0_i32 : i32 to vector<8x128xi32>
    %58 = arith.cmpi eq, %55, %57 : vector<8x128xi32>
    %59 = vector.broadcast %23 : f32 to vector<8x128xf32>
    %60 = arith.select %58, %59, %56 : vector<8x128xi1>, vector<8x128xf32>
    %c1_i32 = arith.constant 1 : i32
    %61 = vector.broadcast %c1_i32 : i32 to vector<8x128xi32>
    %62 = arith.cmpi eq, %55, %61 : vector<8x128xi32>
    %63 = vector.broadcast %27 : f32 to vector<8x128xf32>
    %64 = arith.select %62, %63, %60 : vector<8x128xi1>, vector<8x128xf32>
    %c2_i32 = arith.constant 2 : i32
    %65 = vector.broadcast %c2_i32 : i32 to vector<8x128xi32>
    %66 = arith.cmpi eq, %55, %65 : vector<8x128xi32>
    %67 = vector.broadcast %31 : f32 to vector<8x128xf32>
    %68 = arith.select %66, %67, %64 : vector<8x128xi1>, vector<8x128xf32>
    %c3_i32 = arith.constant 3 : i32
    %69 = vector.broadcast %c3_i32 : i32 to vector<8x128xi32>
    %70 = arith.cmpi eq, %55, %69 : vector<8x128xi32>
    %71 = vector.broadcast %36 : f32 to vector<8x128xf32>
    %72 = arith.select %70, %71, %68 : vector<8x128xi1>, vector<8x128xf32>
    %c4_i32 = arith.constant 4 : i32
    %73 = vector.broadcast %c4_i32 : i32 to vector<8x128xi32>
    %74 = arith.cmpi eq, %55, %73 : vector<8x128xi32>
    %75 = vector.broadcast %41 : f32 to vector<8x128xf32>
    %76 = arith.select %74, %75, %72 : vector<8x128xi1>, vector<8x128xf32>
    %c5_i32 = arith.constant 5 : i32
    %77 = vector.broadcast %c5_i32 : i32 to vector<8x128xi32>
    %78 = arith.cmpi eq, %55, %77 : vector<8x128xi32>
    %79 = vector.broadcast %46 : f32 to vector<8x128xf32>
    %80 = arith.select %78, %79, %76 : vector<8x128xi1>, vector<8x128xf32>
    %c6_i32 = arith.constant 6 : i32
    %81 = vector.broadcast %c6_i32 : i32 to vector<8x128xi32>
    %82 = arith.cmpi eq, %55, %81 : vector<8x128xi32>
    %83 = vector.broadcast %50 : f32 to vector<8x128xf32>
    %84 = arith.select %82, %83, %80 : vector<8x128xi1>, vector<8x128xf32>
    %c7_i32 = arith.constant 7 : i32
    %85 = vector.broadcast %c7_i32 : i32 to vector<8x128xi32>
    %86 = arith.cmpi eq, %55, %85 : vector<8x128xi32>
    %87 = vector.broadcast %54 : f32 to vector<8x128xf32>
    %88 = arith.select %86, %87, %84 : vector<8x128xi1>, vector<8x128xf32>
    %c0_18 = arith.constant 0 : index
    %c0_19 = arith.constant 0 : index
    %c0_20 = arith.constant 0 : index
    %c0_21 = arith.constant 0 : index
    %89 = vector.load %arg6[%c0_18, %c0_19, %c0_20, %c0_21] : memref<1x1x8x128xf32, #tpu.memory_space<vmem>>, vector<1x1x8x128xf32>
    %90 = vector.shape_cast %89 : vector<1x1x8x128xf32> to vector<8x128xf32>
    %91 = vector.shape_cast %88 : vector<8x128xf32> to vector<1x1x8x128xf32>
    tpu.vector_store %arg6[%c0_18, %c0_19, %c0_20, %c0_21], %91 {strides = array<i32>} : memref<1x1x8x128xf32, #tpu.memory_space<vmem>>, vector<1x1x8x128xf32>,
    return
  }
  func.func @transform_0(%arg0: i32, %arg1: i32) -> (i32, i32) {
    %c0_i32 = arith.constant 0 : i32
    %c0_i32_0 = arith.constant 0 : i32
    return %c0_i32, %arg1 : i32, i32
  }
  func.func @transform_1(%arg0: i32, %arg1: i32) -> (i32, i32) {
    %c0_i32 = arith.constant 0 : i32
    return %arg0, %arg1 : i32, i32
  }
  func.func @transform_2(%arg0: i32, %arg1: i32) -> (i32, i32) {
    %c0_i32 = arith.constant 0 : i32
    return %arg0, %arg1 : i32, i32
  }
  func.func @transform_3(%arg0: i32, %arg1: i32) -> (i32, i32) {
    %c0_i32 = arith.constant 0 : i32
    return %arg0, %arg1 : i32, i32
  }
  func.func @transform_4(%arg0: i32, %arg1: i32) -> (i32, i32, i32, i32) {
    %c0_i32 = arith.constant 0 : i32
    %c0_i32_0 = arith.constant 0 : i32
    %c0_i32_1 = arith.constant 0 : i32
    return %arg0, %arg1, %c0_i32, %c0_i32_0 : i32, i32, i32, i32
  }
}

</mosaic_0001>

<llo_original>
// kernel: tpu_custom_call.1
$region0: #{tpu_custom_call.1}
  #allocation0 [shape = 'u32[]', space=smem, size = 0x4, offset = 0x4, fixed_abs, tag = 'smem constant byte address 0x4 - core index']
  #allocation1 [shape = 'u32[72,128]{1,0:T(1,128)}', space=vmem, size = 0x9000, scoped, tag = 'internal scratch']
  %s0 = inlined_call_operand.hbm [shape: f32[1,256], index: 0, kind: input, shape index: {}]
  %s1 = inlined_call_operand.hbm [shape: f32[8,256], index: 1, kind: input, shape index: {}]
  %s2 = inlined_call_operand.hbm [shape: f32[8,256], index: 2, kind: input, shape index: {}]
  %s3 = inlined_call_operand.hbm [shape: f32[8,256], index: 3, kind: input, shape index: {}]
  %s4 = inlined_call_operand.hbm [shape: f32[1,1,8,128], index: 4, kind: output, shape index: {}]
  %s5 = sld [smem:[#allocation0]]
  $region42: #{tpu_custom_call.1} parent=0
    _
  %s7 = ssub.s32 1, %s5
  %s8 = scalar_select 0, %s7, %s5
  $region1: #{tpu_custom_call.1} parent=0
    #allocation2 [shape = 'u8[1024]{0}', space=vmem, size = 0x400, scoped, tag = 'input window, operand 0, single buffered']
    #allocation3 [shape = 's32[1]{0}', space=sflag, size = 0x4, scoped, tag = 'scoped memory for tpu_custom_call.1']
    #allocation4 [shape = 's32[1]{0}', space=sflag, size = 0x4, scoped, tag = 'scoped memory for tpu_custom_call.1']
    #allocation5 [shape = 'u8[8192]{0}', space=vmem, size = 0x2000, scoped, tag = 'input window, operand 1, single buffered']
    #allocation6 [shape = 's32[1]{0}', space=sflag, size = 0x4, scoped, tag = 'scoped memory for tpu_custom_call.1']
    #allocation7 [shape = 'u8[8192]{0}', space=vmem, size = 0x2000, scoped, tag = 'input window, operand 2, single buffered']
    #allocation8 [shape = 'u8[8192]{0}', space=vmem, size = 0x2000, scoped, tag = 'input window, operand 3, single buffered']
    #allocation9 [shape = 's32[1]{0}', space=sflag, size = 0x4, scoped, tag = 'scoped memory for tpu_custom_call.1']
    #allocation10 [shape = 'u8[4096]{0}', space=vmem, size = 0x1000, scoped, tag = 'output window, operand 0, single buffered']
    %9 = vsyncpa [#allocation3], 0
    %10 = vsyncpa [#allocation6], 0
    %11 = vsyncpa [#allocation9], 0
    %12 = vsyncpa [#allocation4], 0
    // Predicated region
    $region2: #{tpu_custom_call.1} parent=1 // pred_check
      _
    $region3: #{tpu_custom_call.1} parent=1 // pred_check_branch
      %14 = sbr.rel (0) target = $region5
    $region4: #{tpu_custom_call.1} parent=1 // pred_region
      %16 = vsyncadd [#allocation3], 0
      %s18 = sshll.u32 %s0, 4
      %s19 = int_to_ptr.hbm [resolvable:$true] %s18
      %s20 = sshll.u32 [#allocation2], 4
      %s21 = int_to_ptr.vmem [resolvable:$true] %s20
      %23 = dma.hbm_to_vmem [thread:$0]  %s19, 32, %s21, [#allocation3]
    $region5: #{tpu_custom_call.1} parent=1 // pred_fallthru
      _
    // Predicated region
    $region6: #{tpu_custom_call.1} parent=1 // pred_check
      _
    $region7: #{tpu_custom_call.1} parent=1 // pred_check_branch
      %25 = sbr.rel (0) target = $region9
    $region8: #{tpu_custom_call.1} parent=1 // pred_region
      %27 = vsyncadd [#allocation6], 0
      %s29 = sshll.u32 %s1, 4
      %s30 = int_to_ptr.hbm [resolvable:$true] %s29
      %s31 = sshll.u32 [#allocation5], 4
      %s32 = int_to_ptr.vmem [resolvable:$true] %s31
      %34 = dma.hbm_to_vmem [thread:$0]  %s30, 256, %s32, [#allocation6]
    $region9: #{tpu_custom_call.1} parent=1 // pred_fallthru
      _
    // Predicated region
    $region10: #{tpu_custom_call.1} parent=1 // pred_check
      _
    $region11: #{tpu_custom_call.1} parent=1 // pred_check_branch
      %36 = sbr.rel (0) target = $region13
    $region12: #{tpu_custom_call.1} parent=1 // pred_region
      %38 = vsyncadd [#allocation6], 0
      %s40 = sshll.u32 %s2, 4
      %s41 = int_to_ptr.hbm [resolvable:$true] %s40
      %s42 = sshll.u32 [#allocation7], 4
      %s43 = int_to_ptr.vmem [resolvable:$true] %s42
      %45 = dma.hbm_to_vmem [thread:$0]  %s41, 256, %s43, [#allocation6]
    $region13: #{tpu_custom_call.1} parent=1 // pred_fallthru
      _
    // Predicated region
    $region14: #{tpu_custom_call.1} parent=1 // pred_check
      _
    $region15: #{tpu_custom_call.1} parent=1 // pred_check_branch
      %47 = sbr.rel (0) target = $region17
    $region16: #{tpu_custom_call.1} parent=1 // pred_region
      %49 = vsyncadd [#allocation9], 0
      %s51 = sshll.u32 %s3, 4
      %s52 = int_to_ptr.hbm [resolvable:$true] %s51
      %s53 = sshll.u32 [#allocation8], 4
      %s54 = int_to_ptr.vmem [resolvable:$true] %s53
      %56 = dma.hbm_to_vmem [thread:$0]  %s52, 256, %s54, [#allocation9]
    $region17: #{tpu_custom_call.1} parent=1 // pred_fallthru
      _
    // Predicated region
    $region18: #{tpu_custom_call.1} parent=1 // pred_check
      _
    $region19: #{tpu_custom_call.1} parent=1 // pred_check_branch
      %58 = sbr.rel (0) target = $region21
    $region20: #{tpu_custom_call.1} parent=1 // pred_region
      %60 = dma.done [#allocation3], 32
    $region21: #{tpu_custom_call.1} parent=1 // pred_fallthru
      _
    // Predicated region
    $region22: #{tpu_custom_call.1} parent=1 // pred_check
      _
    $region23: #{tpu_custom_call.1} parent=1 // pred_check_branch
      %62 = sbr.rel (0) target = $region25
    $region24: #{tpu_custom_call.1} parent=1 // pred_region
      %64 = dma.done [#allocation6], 256
    $region25: #{tpu_custom_call.1} parent=1 // pred_fallthru
      _
    // Predicated region
    $region26: #{tpu_custom_call.1} parent=1 // pred_check
      _
    $region27: #{tpu_custom_call.1} parent=1 // pred_check_branch
      %66 = sbr.rel (0) target = $region29
    $region28: #{tpu_custom_call.1} parent=1 // pred_region
      %68 = dma.done [#allocation6], 256
    $region29: #{tpu_custom_call.1} parent=1 // pred_fallthru
      _
    // Predicated region
    $region30: #{tpu_custom_call.1} parent=1 // pred_check
      _
    $region31: #{tpu_custom_call.1} parent=1 // pred_check_branch
      %70 = sbr.rel (0) target = $region33
    $region32: #{tpu_custom_call.1} parent=1 // pred_region
      %72 = dma.done [#allocation9], 256
    $region33: #{tpu_custom_call.1} parent=1 // pred_fallthru
      _
    %v73 = vld [vmem:[#allocation2] sm:$0x3]
    %v74 = vld [vmem:[#allocation5] sm:$0xff]
    %v75 = vld [vmem:[#allocation5 + $0x8] sm:$0xff]
    %v76 = vld [vmem:[#allocation7] sm:$0xff]
    %v77 = vld [vmem:[#allocation7 + $0x8] sm:$0xff]
    %v78 = vld [vmem:[#allocation8] sm:$0xff]
    %v79 = vld [vmem:[#allocation8 + $0x8] sm:$0xff]
    %v80 = vsub.f32 %v74, %v76
    %v81 = vsub.f32 %v75, %v77
    %v82 = vsub.f32 278.5, %v78
    %v83 = vsub.f32 278.5, %v79
    %v84 = vmul.f32 %v74, 21.3
    %v85 = vmul.f32 %v75, 21.3
    %v86 = vadd.f32 %v84, %v82
    %v87 = vadd.f32 %v85, %v83
    %v88 = vmul.f32 %v76, 21.3
    %v89 = vmul.f32 %v77, 21.3
    %v90 = vadd.f32 %v88, %v82
    %v91 = vadd.f32 %v89, %v83
    %v93 = vperm.slane %v73, 0
    %v94 = vperm.slane %v73, 1
    %v97 = vmul.f32 %v93, %v86
    %v98 = vmul.f32 %v94, %v87
    %v99 = vmul.f32 %v93, %v90
    %v100 = vmul.f32 %v94, %v91
    %v101 = vmul.f32 %v93, %v80
    %v102 = vmul.f32 %v94, %v81
    %v103 = vmul.f32 %v101, %v80
    %v104 = vmul.f32 %v102, %v81
    %v105 = vadd.f32 %v103, %v104
    %106 = vadd.xlane.f32.xlu0 %v105
    %v107 = vpop.xlane.xlu0 %106
    %v108 = vrot.slane %v107, 4
    %v109 = vadd.f32 %v107, %v108
    %v110 = vrot.slane %v109, 2
    %v111 = vadd.f32 %v109, %v110
    %v112 = vrot.slane %v111, 1
    %v113 = vadd.f32 %v111, %v112
    %s114 = vtos %v113
    %v115 = vadd.f32 %v86, %v87
    %116 = vadd.xlane.f32.xlu0 %v115
    %v117 = vpop.xlane.xlu0 %116
    %v118 = vrot.slane %v117, 4
    %v119 = vadd.f32 %v117, %v118
    %v120 = vrot.slane %v119, 2
    %v121 = vadd.f32 %v119, %v120
    %v122 = vrot.slane %v121, 1
    %v123 = vadd.f32 %v121, %v122
    %s124 = vtos %v123
    %v125 = vadd.f32 %v90, %v91
    %126 = vadd.xlane.f32.xlu0 %v125
    %v127 = vpop.xlane.xlu0 %126
    %v128 = vrot.slane %v127, 4
    %v129 = vadd.f32 %v127, %v128
    %v130 = vrot.slane %v129, 2
    %v131 = vadd.f32 %v129, %v130
    %v132 = vrot.slane %v131, 1
    %v133 = vadd.f32 %v131, %v132
    %s134 = vtos %v133
    %v135 = vmul.f32 %v97, %v90
    %v136 = vmul.f32 %v98, %v91
    %v137 = vadd.f32 %v135, %v136
    %138 = vadd.xlane.f32.xlu0 %v137
    %v139 = vpop.xlane.xlu0 %138
    %v140 = vrot.slane %v139, 4
    %v141 = vadd.f32 %v139, %v140
    %v142 = vrot.slane %v141, 2
    %v143 = vadd.f32 %v141, %v142
    %v144 = vrot.slane %v143, 1
    %v145 = vadd.f32 %v143, %v144
    %s146 = vtos %v145
    %v147 = vmul.f32 %v97, %v86
    %v148 = vmul.f32 %v98, %v87
    %v149 = vadd.f32 %v147, %v148
    %150 = vadd.xlane.f32.xlu0 %v149
    %v151 = vpop.xlane.xlu0 %150
    %v152 = vrot.slane %v151, 4
    %v153 = vadd.f32 %v151, %v152
    %v154 = vrot.slane %v153, 2
    %v155 = vadd.f32 %v153, %v154
    %v156 = vrot.slane %v155, 1
    %v157 = vadd.f32 %v155, %v156
    %s158 = vtos %v157
    %v159 = vmul.f32 %v99, %v90
    %v160 = vmul.f32 %v100, %v91
    %v161 = vadd.f32 %v159, %v160
    %162 = vadd.xlane.f32.xlu0 %v161
    %v163 = vpop.xlane.xlu0 %162
    %v164 = vrot.slane %v163, 4
    %v165 = vadd.f32 %v163, %v164
    %v166 = vrot.slane %v165, 2
    %v167 = vadd.f32 %v165, %v166
    %v168 = vrot.slane %v167, 1
    %v169 = vadd.f32 %v167, %v168
    %s170 = vtos %v169
    %v171 = vadd.f32 %v97, %v98
    %172 = vadd.xlane.f32.xlu0 %v171
    %v173 = vpop.xlane.xlu0 %172
    %v174 = vrot.slane %v173, 4
    %v175 = vadd.f32 %v173, %v174
    %v176 = vrot.slane %v175, 2
    %v177 = vadd.f32 %v175, %v176
    %v178 = vrot.slane %v177, 1
    %v179 = vadd.f32 %v177, %v178
    %s180 = vtos %v179
    %v181 = vadd.f32 %v99, %v100
    %182 = vadd.xlane.f32.xlu0 %v181
    %v183 = vpop.xlane.xlu0 %182
    %v184 = vrot.slane %v183, 4
    %v185 = vadd.f32 %v183, %v184
    %v186 = vrot.slane %v185, 2
    %v187 = vadd.f32 %v185, %v186
    %v188 = vrot.slane %v187, 1
    %v189 = vadd.f32 %v187, %v188
    %s190 = vtos %v189
    %v191 = vlaneseq
    %v192 = vshrl.u32 %v191, 7
    %vm193 = vcmp.eq.s32.totalorder %v192, 0
    %v194 = vstv %s114
    %v195 = vsel %vm193, %v194, 0.0
    %vm196 = vcmp.eq.s32.totalorder %v192, 1
    %v197 = vstv %s124
    %v198 = vsel %vm196, %v197, %v195
    %vm199 = vcmp.eq.s32.totalorder %v192, 2
    %v200 = vstv %s134
    %v201 = vsel %vm199, %v200, %v198
    %vm202 = vcmp.eq.s32.totalorder %v192, 3
    %v203 = vstv %s146
    %v204 = vsel %vm202, %v203, %v201
    %vm205 = vcmp.eq.s32.totalorder %v192, 4
    %v206 = vstv %s158
    %v207 = vsel %vm205, %v206, %v204
    %vm208 = vcmp.eq.s32.totalorder %v192, 5
    %v209 = vstv %s170
    %v210 = vsel %vm208, %v209, %v207
    %vm211 = vcmp.eq.s32.totalorder %v192, 6
    %v212 = vstv %s180
    %v213 = vsel %vm211, %v212, %v210
    %vm214 = vcmp.eq.s32.totalorder %v192, 7
    %v215 = vstv %s190
    %v216 = vsel %vm214, %v215, %v213
    %217 = vst [vmem:[#allocation10] sm:$0xff] %v216
    // Predicated region
    $region34: #{tpu_custom_call.1} parent=1 // pred_check
      _
    $region35: #{tpu_custom_call.1} parent=1 // pred_check_branch
      %219 = sbr.rel (0) target = $region37
    $region36: #{tpu_custom_call.1} parent=1 // pred_region
      %221 = vsyncadd [#allocation4], 0
      %s223 = sshll.u32 [#allocation10], 4
      %s224 = int_to_ptr.vmem [resolvable:$true] %s223
      %s225 = sshll.u32 %s4, 4
      %s226 = int_to_ptr.hbm [resolvable:$true] %s225
      %228 = dma.vmem_to_hbm [thread:$0]  %s224, 128, %s226, [#allocation4]
    $region37: #{tpu_custom_call.1} parent=1 // pred_fallthru
      _
    // Predicated region
    $region38: #{tpu_custom_call.1} parent=1 // pred_check
      _
    $region39: #{tpu_custom_call.1} parent=1 // pred_check_branch
      %230 = sbr.rel (0) target = $region41
    $region40: #{tpu_custom_call.1} parent=1 // pred_region
      %232 = dma.done [#allocation4], 128
    $region41: #{tpu_custom_call.1} parent=1 // pred_fallthru
      _
    %233 = vsyncpa [#allocation3], 1
    %234 = vsyncpa [#allocation6], 1
    %235 = vsyncpa [#allocation9], 1
    %236 = vsyncpa [#allocation4], 1

</llo_original>
